<compile_context>
chip_gen: v7x
topology: tpu7x:2x2x1
jax: 0.10.0
libtpu: 0.0.40
codegen_flags: <defaults>
</compile_context>

<pallas_src>
import functools

import numpy as np
import jax
import jax.numpy as jnp
from jax.experimental import pallas as pl
from jax.experimental.pallas import tpu as pltpu


def _round_up(x, m):
    return ((x + m - 1) // m) * m


# --------------------------------------------------------------------------
# Pallas kernel: Gram-matrix contrastive loss, accumulated over row tiles.
# --------------------------------------------------------------------------
def _contrastive_kernel(e_i_ref, e_all_ref, nrm2_row_ref, sum_row_ref,
                        mask_ref, out_ref, *, margin, eps, true_d):
    step = pl.program_id(0)

    @pl.when(step == 0)
    def _init():
        out_ref[...] = jnp.zeros_like(out_ref)

    e_i = e_i_ref[...]                         # [TB, Dp]   (rows of this tile)
    e_all = e_all_ref[...]                     # [Bp, Dp]   (resident full E)

    # Gram block on the MXU: G[i, j] = <e_i[i], e_all[j]>
    g = jax.lax.dot_general(
        e_i, e_all, (((1,), (1,)), ((), ())),
        preferred_element_type=jnp.float32)    # [TB, Bp]

    # Per-row norms / sums for this tile (cross-lane reduce, XLU).
    n_i = jnp.sum(e_i * e_i, axis=-1, keepdims=True)   # [TB, 1]
    s_i = jnp.sum(e_i, axis=-1, keepdims=True)         # [TB, 1]
    n_j = nrm2_row_ref[...]                             # [1, Bp]
    s_j = sum_row_ref[...]                              # [1, Bp]

    # Exact torch F.pairwise_distance semantics:
    #   ||a - b + eps||^2 = ||a||^2 + ||b||^2 - 2<a,b>
    #                       + 2*eps*(sum(a) - sum(b)) + D*eps^2
    dist2 = (n_i + n_j - 2.0 * g) \
        + (2.0 * eps) * (s_i - s_j) \
        + (true_d * eps * eps)                          # [TB, Bp]

    m = mask_ref[...]                                   # [TB, Bp] int32

    # Positive pairs: sum of squared distances.
    pos_loss = jnp.sum(jnp.where(m == 1, dist2, 0.0))

    # Negative pairs: relu(margin - dist)^2.
    d = jnp.sqrt(jnp.maximum(dist2, 0.0))
    hinge = jnp.maximum(margin - d, 0.0)
    neg_loss = jnp.sum(jnp.where(m == 2, hinge * hinge, 0.0))

    out_ref[...] += pos_loss + neg_loss


def _run_kernel(e_pad, nrm2_row, sum_row, mask, margin, eps, true_d, tb):
    Bp, Dp = e_pad.shape
    n_tiles = Bp // tb

    kern = functools.partial(_contrastive_kernel,
                             margin=margin, eps=eps, true_d=true_d)

    flops = 2 * Bp * Bp * Dp + 12 * Bp * Bp
    bytes_accessed = (2 * Bp * Dp + Bp * Bp + 2 * Bp) * 4 + 4

    out = pl.pallas_call(
        kern,
        out_shape=jax.ShapeDtypeStruct((1, 1), jnp.float32),
        grid_spec=pltpu.PrefetchScalarGridSpec(
            num_scalar_prefetch=0,
            grid=(n_tiles,),
            in_specs=[
                pl.BlockSpec((tb, Dp), lambda i: (i, 0)),   # E row tile
                pl.BlockSpec((Bp, Dp), lambda i: (0, 0)),   # E full (resident)
                pl.BlockSpec((1, Bp), lambda i: (0, 0)),    # per-row norms^2
                pl.BlockSpec((1, Bp), lambda i: (0, 0)),    # per-row sums
                pl.BlockSpec((tb, Bp), lambda i: (i, 0)),   # pair-type mask
            ],
            out_specs=pl.BlockSpec((1, 1), lambda i: (0, 0)),
        ),
        compiler_params=pltpu.CompilerParams(
            dimension_semantics=("arbitrary",)),
        cost_estimate=pl.CostEstimate(
            flops=int(flops),
            transcendentals=int(Bp * Bp),
            bytes_accessed=int(bytes_accessed)),
    )(e_pad, e_pad, nrm2_row, sum_row, mask)
    return out[0, 0]


# --------------------------------------------------------------------------
# Jittable wrapper: in-graph all-pairs selector (same-label = positive,
# cross-label = negative, upper triangle i < j) + padding to TPU tile sizes.
# --------------------------------------------------------------------------
def contrastive_loss(embeddings, labels, *, margin, eps=1e-6):
    """Forward pass of ContrastiveLoss (sum-reduced scalar)."""
    embeddings = jnp.asarray(embeddings, jnp.float32)
    labels = jnp.asarray(labels)
    B, D = embeddings.shape

    Bp0 = max(8, _round_up(B, 8))
    TB = min(Bp0, 256)                 # row-tile; grid is (Bp // TB,)
    Bp = _round_up(Bp0, TB)
    Dp = max(128, _round_up(D, 128))   # lane-align the contraction dim

    e_pad = jnp.pad(embeddings, ((0, Bp - B), (0, Dp - D)))

    # Row-vector norms / sums for the "b" side (precomputed in-graph so the
    # kernel never needs a sublane->lane transpose).
    nrm2_row = jnp.sum(e_pad * e_pad, axis=-1)[None, :]   # [1, Bp]
    sum_row = jnp.sum(e_pad, axis=-1)[None, :]            # [1, Bp]

    # Pair-type mask: 1 = positive (same label), 2 = negative, 0 = skip.
    labels_pad = jnp.pad(labels, (0, Bp - B))
    idx = jnp.arange(Bp)
    triu = idx[:, None] < idx[None, :]
    valid = idx < B
    vmask = valid[:, None] & valid[None, :]
    same = labels_pad[:, None] == labels_pad[None, :]
    mask = jnp.where(triu & vmask, jnp.where(same, 1, 2), 0).astype(jnp.int32)

    return _run_kernel(e_pad, nrm2_row, sum_row, mask,
                       float(margin), float(eps), float(D), TB)


# --------------------------------------------------------------------------
# Plain-JAX reference (gather-based, matches torch semantics) for checking.
# --------------------------------------------------------------------------
def _reference(embeddings, labels, margin, eps=1e-6):
    embeddings = jnp.asarray(embeddings, jnp.float32)
    labels = np.asarray(labels)
    B = labels.shape[0]
    ii, jj = np.triu_indices(B, k=1)
    same = labels[ii] == labels[jj]
    pos_a, pos_b = ii[same], jj[same]
    neg_a, neg_b = ii[~same], jj[~same]

    dp = embeddings[pos_a] - embeddings[pos_b] + eps
    pos_loss = jnp.sum(dp * dp, axis=-1)
    dn = embeddings[neg_a] - embeddings[neg_b] + eps
    neg_d = jnp.sqrt(jnp.sum(dn * dn, axis=-1))
    neg_loss = jnp.maximum(margin - neg_d, 0.0) ** 2
    return jnp.sum(pos_loss) + jnp.sum(neg_loss)


if __name__ == "__main__":
    key = jax.random.PRNGKey(0)
    k_emb, k_lbl = jax.random.split(key)

    B, D = 8, 32                     # batch of 8 embeddings, hidden dim 32
    MARGIN = 1.0
    embeddings = jax.random.normal(k_emb, (B, D), dtype=jnp.float32)
    labels = jax.random.randint(k_lbl, (B,), 0, 3, dtype=jnp.int32)

    loss_fn = jax.jit(functools.partial(contrastive_loss, margin=MARGIN))
    loss = jax.block_until_ready(loss_fn(embeddings, labels))

    ref = _reference(embeddings, np.asarray(labels), MARGIN)
    assert np.allclose(np.asarray(loss), np.asarray(ref), rtol=1e-4, atol=1e-3), \
        f"mismatch: kernel={loss} ref={ref}"

    print("KERNEL_OK")
</pallas_src>

<mosaic_0001>
module attributes {stable_mosaic.version = 11 : i64} {
  func.func @_contrastive_kernel(%arg0: i32, %arg1: memref<8x128xf32, #tpu.memory_space<vmem>>, %arg2: memref<8x128xf32, #tpu.memory_space<vmem>>, %arg3: memref<1x8xf32, #tpu.memory_space<vmem>>, %arg4: memref<1x8xf32, #tpu.memory_space<vmem>>, %arg5: memref<8x8xi32, #tpu.memory_space<vmem>>, %arg6: memref<1x1xf32, #tpu.memory_space<vmem>>) attributes {dimension_semantics = [#tpu.dimension_semantics<arbitrary>], iteration_bounds = array<i64: 1>, scalar_prefetch = 0 : i64, scratch_operands = 0 : i64, tpu.core_type = #tpu.core_type<tc>, window_params = [{transform_indices = @transform_0, window_bounds = array<i64: 8, 128>}, {pipeline_mode = #tpu.pipeline_mode<synchronous>, transform_indices = @transform_1, window_bounds = array<i64: 8, 128>}, {pipeline_mode = #tpu.pipeline_mode<synchronous>, transform_indices = @transform_2, window_bounds = array<i64: 1, 8>}, {pipeline_mode = #tpu.pipeline_mode<synchronous>, transform_indices = @transform_3, window_bounds = array<i64: 1, 8>}, {transform_indices = @transform_4, window_bounds = array<i64: 8, 8>}, {pipeline_mode = #tpu.pipeline_mode<synchronous>, transform_indices = @transform_5, window_bounds = array<i64: 1, 1>}]} {
    %c0_i32 = arith.constant 0 : i32
    %0 = arith.cmpi eq, %arg0, %c0_i32 : i32
    %1 = arith.extui %0 : i1 to i32
    %c0_i32_0 = arith.constant 0 : i32
    %2 = arith.cmpi ne, %1, %c0_i32_0 : i32
    scf.if %2 {
      %cst_26 = arith.constant 0.000000e+00 : f32
      %57 = vector.broadcast %cst_26 : f32 to vector<1x1xf32>
      %c0_27 = arith.constant 0 : index
      %c0_28 = arith.constant 0 : index
      %58 = vector.load %arg6[%c0_27, %c0_28] : memref<1x1xf32, #tpu.memory_space<vmem>>, vector<1x1xf32>
      tpu.vector_store %arg6[%c0_27, %c0_28], %57 {strides = array<i32>} : memref<1x1xf32, #tpu.memory_space<vmem>>, vector<1x1xf32>,
    } else {
    }
    %c0 = arith.constant 0 : index
    %c0_1 = arith.constant 0 : index
    %3 = vector.load %arg1[%c0, %c0_1] : memref<8x128xf32, #tpu.memory_space<vmem>>, vector<8x128xf32>
    %c0_2 = arith.constant 0 : index
    %c0_3 = arith.constant 0 : index
    %4 = vector.load %arg2[%c0_2, %c0_3] : memref<8x128xf32, #tpu.memory_space<vmem>>, vector<8x128xf32>
    %cst = arith.constant dense<0.000000e+00> : vector<8x8xf32>
    %5 = tpu.matmul %3, %4, %cst {dimension_numbers = #tpu.dot_dimension_numbers<[1], [1], [0], [0], [0, 0, 1, 0], [], []>} : vector<8x128xf32>, vector<8x128xf32>, vector<8x8xf32> -> vector<8x8xf32>
    %6 = arith.mulf %3, %3 : vector<8x128xf32>
    %cst_4 = arith.constant dense<0.000000e+00> : vector<8xf32>
    %7 = vector.multi_reduction <add>, %6, %cst_4 [1] : vector<8x128xf32> to vector<8xf32>
    %8 = vector.shape_cast %7 : vector<8xf32> to vector<8x1xf32>
    %cst_5 = arith.constant dense<0.000000e+00> : vector<8xf32>
    %9 = vector.multi_reduction <add>, %3, %cst_5 [1] : vector<8x128xf32> to vector<8xf32>
    %10 = vector.shape_cast %9 : vector<8xf32> to vector<8x1xf32>
    %c0_6 = arith.constant 0 : index
    %c0_7 = arith.constant 0 : index
    %11 = vector.load %arg3[%c0_6, %c0_7] : memref<1x8xf32, #tpu.memory_space<vmem>>, vector<1x8xf32>
    %c0_8 = arith.constant 0 : index
    %c0_9 = arith.constant 0 : index
    %12 = vector.load %arg4[%c0_8, %c0_9] : memref<1x8xf32, #tpu.memory_space<vmem>>, vector<1x8xf32>
    %13 = vector.broadcast %8 : vector<8x1xf32> to vector<8x8xf32>
    %14 = vector.broadcast %11 : vector<1x8xf32> to vector<8x8xf32>
    %15 = arith.addf %13, %14 : vector<8x8xf32>
    %cst_10 = arith.constant 2.000000e+00 : f32
    %16 = vector.broadcast %cst_10 : f32 to vector<8x8xf32>
    %17 = arith.mulf %16, %5 : vector<8x8xf32>
    %18 = arith.subf %15, %17 : vector<8x8xf32>
    %19 = vector.broadcast %10 : vector<8x1xf32> to vector<8x8xf32>
    %20 = vector.broadcast %12 : vector<1x8xf32> to vector<8x8xf32>
    %21 = arith.subf %19, %20 : vector<8x8xf32>
    %cst_11 = arith.constant 2.000000e-06 : f32
    %22 = vector.broadcast %cst_11 : f32 to vector<8x8xf32>
    %23 = arith.mulf %22, %21 : vector<8x8xf32>
    %24 = arith.addf %18, %23 : vector<8x8xf32>
    %cst_12 = arith.constant 3.200000e-11 : f32
    %25 = vector.broadcast %cst_12 : f32 to vector<8x8xf32>
    %26 = arith.addf %24, %25 : vector<8x8xf32>
    %c0_13 = arith.constant 0 : index
    %c0_14 = arith.constant 0 : index
    %27 = vector.load %arg5[%c0_13, %c0_14] : memref<8x8xi32, #tpu.memory_space<vmem>>, vector<8x8xi32>
    %c1_i32 = arith.constant 1 : i32
    %28 = vector.broadcast %c1_i32 : i32 to vector<8x8xi32>
    %29 = arith.cmpi eq, %27, %28 : vector<8x8xi32>
    %cst_15 = arith.constant 0.000000e+00 : f32
    %30 = vector.broadcast %cst_15 : f32 to vector<8x8xf32>
    %31 = arith.select %29, %26, %30 : vector<8x8xi1>, vector<8x8xf32>
    %32 = vector.shape_cast %31 : vector<8x8xf32> to vector<1x8x8xf32>
    %cst_16 = arith.constant dense<0.000000e+00> : vector<1xf32>
    %33 = vector.multi_reduction <add>, %32, %cst_16 [1, 2] : vector<1x8x8xf32> to vector<1xf32>
    %34 = vector.shape_cast %33 : vector<1xf32> to vector<1x1x1xf32>
    %35 = vector.extract %34[0, 0, 0] : f32 from vector<1x1x1xf32>
    %cst_17 = arith.constant 0.000000e+00 : f32
    %36 = vector.broadcast %cst_17 : f32 to vector<8x8xf32>
    %37 = arith.maximumf %26, %36 : vector<8x8xf32>
    %38 = math.sqrt %37 : vector<8x8xf32>
    %cst_18 = arith.constant 1.000000e+00 : f32
    %39 = vector.broadcast %cst_18 : f32 to vector<8x8xf32>
    %40 = arith.subf %39, %38 : vector<8x8xf32>
    %cst_19 = arith.constant 0.000000e+00 : f32
    %41 = vector.broadcast %cst_19 : f32 to vector<8x8xf32>
    %42 = arith.maximumf %40, %41 : vector<8x8xf32>
    %c2_i32 = arith.constant 2 : i32
    %43 = vector.broadcast %c2_i32 : i32 to vector<8x8xi32>
    %44 = arith.cmpi eq, %27, %43 : vector<8x8xi32>
    %45 = arith.mulf %42, %42 : vector<8x8xf32>
    %cst_20 = arith.constant 0.000000e+00 : f32
    %46 = vector.broadcast %cst_20 : f32 to vector<8x8xf32>
    %47 = arith.select %44, %45, %46 : vector<8x8xi1>, vector<8x8xf32>
    %48 = vector.shape_cast %47 : vector<8x8xf32> to vector<1x8x8xf32>
    %cst_21 = arith.constant dense<0.000000e+00> : vector<1xf32>
    %49 = vector.multi_reduction <add>, %48, %cst_21 [1, 2] : vector<1x8x8xf32> to vector<1xf32>
    %50 = vector.shape_cast %49 : vector<1xf32> to vector<1x1x1xf32>
    %51 = vector.extract %50[0, 0, 0] : f32 from vector<1x1x1xf32>
    %c0_22 = arith.constant 0 : index
    %c0_23 = arith.constant 0 : index
    %52 = vector.load %arg6[%c0_22, %c0_23] : memref<1x1xf32, #tpu.memory_space<vmem>>, vector<1x1xf32>
    %53 = arith.addf %35, %51 : f32
    %54 = vector.broadcast %53 : f32 to vector<1x1xf32>
    %55 = arith.addf %52, %54 : vector<1x1xf32>
    %c0_24 = arith.constant 0 : index
    %c0_25 = arith.constant 0 : index
    %56 = vector.load %arg6[%c0_24, %c0_25] : memref<1x1xf32, #tpu.memory_space<vmem>>, vector<1x1xf32>
    tpu.vector_store %arg6[%c0_24, %c0_25], %55 {strides = array<i32>} : memref<1x1xf32, #tpu.memory_space<vmem>>, vector<1x1xf32>,
    return
  }
  func.func @transform_0(%arg0: i32) -> (i32, i32) {
    %c0_i32 = arith.constant 0 : i32
    %c0_i32_0 = arith.constant 0 : i32
    return %arg0, %c0_i32 : i32, i32
  }
  func.func @transform_1(%arg0: i32) -> (i32, i32) {
    %c0_i32 = arith.constant 0 : i32
    %c0_i32_0 = arith.constant 0 : i32
    %c0_i32_1 = arith.constant 0 : i32
    return %c0_i32, %c0_i32_0 : i32, i32
  }
  func.func @transform_2(%arg0: i32) -> (i32, i32) {
    %c0_i32 = arith.constant 0 : i32
    %c0_i32_0 = arith.constant 0 : i32
    %c0_i32_1 = arith.constant 0 : i32
    return %c0_i32, %c0_i32_0 : i32, i32
  }
  func.func @transform_3(%arg0: i32) -> (i32, i32) {
    %c0_i32 = arith.constant 0 : i32
    %c0_i32_0 = arith.constant 0 : i32
    %c0_i32_1 = arith.constant 0 : i32
    return %c0_i32, %c0_i32_0 : i32, i32
  }
  func.func @transform_4(%arg0: i32) -> (i32, i32) {
    %c0_i32 = arith.constant 0 : i32
    %c0_i32_0 = arith.constant 0 : i32
    return %arg0, %c0_i32 : i32, i32
  }
  func.func @transform_5(%arg0: i32) -> (i32, i32) {
    %c0_i32 = arith.constant 0 : i32
    %c0_i32_0 = arith.constant 0 : i32
    %c0_i32_1 = arith.constant 0 : i32
    return %c0_i32, %c0_i32_0 : i32, i32
  }
}

</mosaic_0001>

<llo_original>
// kernel: contrastive_loss.1
$region0: #{contrastive_loss.1}
  #allocation0 [shape = 'u32[]', space=smem, size = 0x4, offset = 0x4, fixed_abs, tag = 'smem constant byte address 0x4 - core index']
  #allocation1 [shape = 'u32[144,128]{1,0:T(1,128)}', space=vmem, size = 0x12000, scoped, tag = 'internal scratch']
  %s0 = inlined_call_operand.vmem [shape: f32[8,128], index: 0, kind: input, shape index: {}, may-alias: {0,1}]
  %s1 = inlined_call_operand.vmem [shape: f32[8,128], index: 1, kind: input, shape index: {}, may-alias: {0,1}]
  %s2 = inlined_call_operand.vmem [shape: f32[1,8], index: 2, kind: input, shape index: {}]
  %s3 = inlined_call_operand.vmem [shape: f32[1,8], index: 3, kind: input, shape index: {}]
  %s4 = inlined_call_operand.vmem [shape: s32[8,8], index: 4, kind: input, shape index: {}]
  %s5 = inlined_call_operand.hbm [shape: f32[1,1], index: 5, kind: output, shape index: {}]
  %s6 = sld [smem:[#allocation0]]
  $region34: #{contrastive_loss.1} parent=0
    _
  %s8 = ssub.s32 1, %s6
  %s9 = scalar_select 0, %s8, %s6
  $region1: #{contrastive_loss.1} parent=0
    #allocation2 [shape = 'u8[512]{0}', space=vmem, size = 0x400, scoped, tag = 'output window, operand 0, single buffered']
    #allocation3 [shape = 's32[1]{0}', space=sflag, size = 0x4, scoped, tag = 'scoped memory for contrastive_loss.1']
    %10 = vsyncpa [#allocation3], 0
    // Predicated region
    $region2: #{contrastive_loss.1} parent=1 // pred_check
      _
    $region3: #{contrastive_loss.1} parent=1 // pred_check_branch
      %12 = sbr.rel (0) target = $region5
    $region4: #{contrastive_loss.1} parent=1 // pred_region
      _
    $region5: #{contrastive_loss.1} parent=1 // pred_fallthru
      _
    // Predicated region
    $region6: #{contrastive_loss.1} parent=1 // pred_check
      _
    $region7: #{contrastive_loss.1} parent=1 // pred_check_branch
      %14 = sbr.rel (0) target = $region9
    $region8: #{contrastive_loss.1} parent=1 // pred_region
      _
    $region9: #{contrastive_loss.1} parent=1 // pred_fallthru
      _
    // Predicated region
    $region10: #{contrastive_loss.1} parent=1 // pred_check
      _
    $region11: #{contrastive_loss.1} parent=1 // pred_check_branch
      %16 = sbr.rel (0) target = $region13
    $region12: #{contrastive_loss.1} parent=1 // pred_region
      _
    $region13: #{contrastive_loss.1} parent=1 // pred_fallthru
      _
    // Predicated region
    $region14: #{contrastive_loss.1} parent=1 // pred_check
      _
    $region15: #{contrastive_loss.1} parent=1 // pred_check_branch
      %18 = sbr.rel (0) target = $region17
    $region16: #{contrastive_loss.1} parent=1 // pred_region
      _
    $region17: #{contrastive_loss.1} parent=1 // pred_fallthru
      _
    // Predicated region
    $region18: #{contrastive_loss.1} parent=1 // pred_check
      _
    $region19: #{contrastive_loss.1} parent=1 // pred_check_branch
      %20 = sbr.rel (0) target = $region21
    $region20: #{contrastive_loss.1} parent=1 // pred_region
      _
    $region21: #{contrastive_loss.1} parent=1 // pred_fallthru
      _
    %p21 = scmp.eq.s32.totalorder 0, 0
    // Predicated region
    $region22: #{contrastive_loss.1} parent=1 // pred_check
      %p22 = pneg %p21
    $region23: #{contrastive_loss.1} parent=1 // pred_check_branch
      %24 = sbr.rel (%p22) target = $region25
    $region24: #{contrastive_loss.1} parent=1 // pred_region
      %vm25 = vcmask 0
      %26 = vst.msk [vmem:[#allocation2] sm:$0x1] %vm25, 0.0
    $region25: #{contrastive_loss.1} parent=1 // pred_fallthru
      _
    %v27 = vld [vmem:[%s0] sm:$0xff]
    %v28 = vld [vmem:[%s1] sm:$0xff]
    %29 = vmatprep.subr.mxu0 0.0
    %30 = vmatpush1.xpose.msra.mxu0 %v28
    %31 = vmatprep.subr.mxu0 0.0
    %32 = vmatpush1.xpose.msra.mxu0 0.0
    %33 = vmatprep.subr.mxu0 0.0
    %34 = vmatpush1.xpose.msra.mxu0 0.0
    %35 = vmatprep.subr.mxu0 0.0
    %36 = vmatpush1.xpose.msra.mxu0 0.0
    %37 = vmatprep.subr.mxu0 0.0
    %38 = vmatpush1.xpose.msra.mxu0 0.0
    %39 = vmatprep.subr.mxu0 0.0
    %40 = vmatpush1.xpose.msra.mxu0 0.0
    %41 = vmatprep.subr.mxu0 0.0
    %42 = vmatpush1.xpose.msra.mxu0 0.0
    %43 = vmatprep.subr.mxu0 0.0
    %44 = vmatpush1.xpose.msra.mxu0 0.0
    %45 = vmatprep.subr.mxu0 0.0
    %46 = vmatpush1.xpose.msra.mxu0 0.0
    %47 = vmatprep.subr.mxu0 0.0
    %48 = vmatpush1.xpose.msra.mxu0 0.0
    %49 = vmatprep.subr.mxu0 0.0
    %50 = vmatpush1.xpose.msra.mxu0 0.0
    %51 = vmatprep.subr.mxu0 0.0
    %52 = vmatpush1.xpose.msra.mxu0 0.0
    %53 = vmatprep.subr.mxu0 0.0
    %54 = vmatpush1.xpose.msra.mxu0 0.0
    %55 = vmatprep.subr.mxu0 0.0
    %56 = vmatpush1.xpose.msra.mxu0 0.0
    %57 = vmatprep.subr.mxu0 0.0
    %58 = vmatpush1.xpose.msra.mxu0 0.0
    %59 = vmatprep.subr.mxu0 0.0
    %60 = vmatpush1.xpose.msra.mxu0 0.0
    %61 = vmatprep.subr.mxu0 0.0
    %62 = vmatpush1.xpose.msra.mxu0 0.0
    %63 = vmatprep.subr.mxu0 0.0
    %64 = vmatpush1.xpose.msra.mxu0 0.0
    %65 = vmatprep.subr.mxu0 0.0
    %66 = vmatpush1.xpose.msra.mxu0 0.0
    %67 = vmatprep.subr.mxu0 0.0
    %68 = vmatpush1.xpose.msra.mxu0 0.0
    %69 = vmatprep.subr.mxu0 0.0
    %70 = vmatpush1.xpose.msra.mxu0 0.0
    %71 = vmatprep.subr.mxu0 0.0
    %72 = vmatpush1.xpose.msra.mxu0 0.0
    %73 = vmatprep.subr.mxu0 0.0
    %74 = vmatpush1.xpose.msra.mxu0 0.0
    %75 = vmatprep.subr.mxu0 0.0
    %76 = vmatpush1.xpose.msra.mxu0 0.0
    %77 = vmatprep.subr.mxu0 0.0
    %78 = vmatpush1.xpose.msra.mxu0 0.0
    %79 = vmatprep.subr.mxu0 0.0
    %80 = vmatpush1.xpose.msra.mxu0 0.0
    %81 = vmatprep.subr.mxu0 0.0
    %82 = vmatpush1.xpose.msra.mxu0 0.0
    %83 = vmatprep.subr.mxu0 0.0
    %84 = vmatpush1.xpose.msra.mxu0 0.0
    %85 = vmatprep.subr.mxu0 0.0
    %86 = vmatpush1.xpose.msra.mxu0 0.0
    %87 = vmatprep.subr.mxu0 0.0
    %88 = vmatpush1.xpose.msra.mxu0 0.0
    %89 = vmatprep.subr.mxu0 0.0
    %90 = vmatpush1.xpose.msra.mxu0 0.0
    %91 = vmatprep.subr.mxu0 0.0
    %92 = vmatpush1.xpose.msra.mxu0 0.0
    %93 = vmatprep.mubr.f32.mxu0 0.0
    %94 = vmatmul.mubr.f32.gmra.mrb[0].mxu0 %v27
    %v95 = vpop.f32.mrb[0].mxu0
    %v96 = vadd.f32 0.0, %v95
    %v97 = vpop.f32.mrb[0].mxu0
    %98 = vdwg.mxu0
    %v99 = vmul.f32 %v27, %v27
    %100 = vadd.xlane.f32.xlu0 %v99
    %v101 = vpop.xlane.xlu0 %100
    %102 = vadd.xlane.f32.xlu0 %v27
    %v103 = vpop.xlane.xlu0 %102
    %v104 = vld [vmem:[%s2] sm:$0x1]
    %v105 = vld [vmem:[%s3] sm:$0x1]
    %v107 = vlaneseq
    %v108 = vshrl.u32 %v107, 7
    %v109 = vsub.s32 0, %v108
    %v110 = vrot.slane %v104, %v109
    %v112 = vadd.f32 %v101, %v110
    %v113 = vmul.f32 %v96, 2.0
    %v114 = vsub.f32 %v112, %v113
    %v116 = vlaneseq
    %v117 = vshrl.u32 %v116, 7
    %v118 = vsub.s32 0, %v117
    %v119 = vrot.slane %v105, %v118
    %v121 = vsub.f32 %v103, %v119
    %v122 = vmul.f32 %v121, 2e-06
    %v123 = vadd.f32 %v114, %v122
    %v124 = vadd.f32 %v123, 3.2e-11
    %v125 = vld [vmem:[%s4] sm:$0xff]
    %vm126 = vcmp.eq.s32.totalorder %v125, 1
    %v127 = vsel %vm126, %v124, 0.0
    %vm128 = vcmask 64512
    %v129 = vsel %vm128, %v127, 0.0
    %130 = vadd.xlane.f32.xlu0 %v129
    %v131 = vpop.xlane.xlu0 %130
    %v132 = vrot.slane %v131, 4
    %v133 = vadd.f32 %v131, %v132
    %v134 = vrot.slane %v133, 2
    %v135 = vadd.f32 %v133, %v134
    %v136 = vrot.slane %v135, 1
    %v137 = vadd.f32 %v135, %v136
    %s138 = vtos %v137
    %v139 = vmax.f32 %v124, 0.0
    %v140 = vrsqrt.pop %v139
    %v141 = vmul.f32 %v139, %v140
    %vm142 = vcmp.eq.f32.partialorder %v139, inf
    %v143 = vsel %vm142, %v139, %v141
    %vm144 = vcmp.eq.f32.partialorder %v139, 0.0
    %v145 = vand.u32 %v139, 2147483648
    %v146 = vsel %vm144, %v145, %v143
    %v147 = vsub.f32 1.0, %v146
    %v148 = vmax.f32 %v147, 0.0
    %vm149 = vcmp.eq.s32.totalorder %v125, 2
    %v150 = vmul.f32 %v148, %v148
    %v151 = vsel %vm149, %v150, 0.0
    %v152 = vsel %vm128, %v151, 0.0
    %153 = vadd.xlane.f32.xlu0 %v152
    %v154 = vpop.xlane.xlu0 %153
    %v155 = vrot.slane %v154, 4
    %v156 = vadd.f32 %v154, %v155
    %v157 = vrot.slane %v156, 2
    %v158 = vadd.f32 %v156, %v157
    %v159 = vrot.slane %v158, 1
    %v160 = vadd.f32 %v158, %v159
    %s161 = vtos %v160
    %v162 = vld [vmem:[#allocation2] sm:$0x1]
    %s163 = sadd.f32 %s138, %s161
    %v164 = vstv %s163
    %v165 = vadd.f32 %v162, %v164
    %vm166 = vcmask 0
    %167 = vst.msk [vmem:[#allocation2] sm:$0x1] %vm166, %v165
    // Predicated region
    $region26: #{contrastive_loss.1} parent=1 // pred_check
      _
    $region27: #{contrastive_loss.1} parent=1 // pred_check_branch
      %169 = sbr.rel (0) target = $region29
    $region28: #{contrastive_loss.1} parent=1 // pred_region
      %s171 = ssub.s32 16, 16
      %172 = vsyncadd [#allocation3], %s171
      %s174 = sshll.u32 [#allocation2], 4
      %s175 = int_to_ptr.vmem [resolvable:$true] %s174
      %177 = dma.vmem_to_hbm [thread:$0]  %s175, 16, %s5, [#allocation3]
    $region29: #{contrastive_loss.1} parent=1 // pred_fallthru
      _
    // Predicated region
    $region30: #{contrastive_loss.1} parent=1 // pred_check
      _
    $region31: #{contrastive_loss.1} parent=1 // pred_check_branch
      %179 = sbr.rel (0) target = $region33
    $region32: #{contrastive_loss.1} parent=1 // pred_region
      %180 = dma.done [#allocation3], 16
    $region33: #{contrastive_loss.1} parent=1 // pred_fallthru
      _
    %181 = vsyncpa [#allocation3], 1

</llo_original>
